<compile_context>
chip_gen: v7x
topology: tpu7x:2x2x1
jax: 0.10.0
libtpu: 0.0.40
codegen_flags: <defaults>
</compile_context>

<pallas_src>
import functools

import jax
import jax.numpy as jnp
from jax.experimental import pallas as pl
from jax.experimental.pallas import tpu as pltpu

_LANE = 128


def _controller_kernel(x_ref, w_ref, b_ref, o_ref):
    """One batch tile of sigmoid(x @ W + b).

    x_ref: (TB, In)        f32 or bf16 (MXU input dtype)
    w_ref: (In, Out_pad)   same dtype as x_ref (pre-transposed, lane-padded)
    b_ref: (1, Out_pad)    f32
    o_ref: (TB, Out_pad)   f32 (Out_pad % 128 == 0 -> lane-dense unmasked store)
    """
    # Canonical (M,K)x(K,N) contraction; weight was transposed once at prep
    # time, so no MXU-side / XLU transpose is needed.
    z = jnp.dot(x_ref[...], w_ref[...], preferred_element_type=jnp.float32)
    z = z + b_ref[...]                 # f32 epilogue (VPU), bias broadcast over batch
    z = jnp.clip(z, -30.0, 30.0)       # keep exp() finite for any input magnitude
    # sigmoid(z) = 1 / (1 + exp(-z)); exp rides the EUP, division is exact.
    o_ref[...] = (1.0 / (1.0 + jnp.exp(-z))).astype(o_ref.dtype)


def prepare_controller_params(weight, bias, *, use_bf16=False):
    """One-time parameter prep (hoisted out of the hot path).

    weight: (num_outputs, num_inputs) f32, bias: (num_outputs,) f32.
    Returns:
      w_pad: (num_inputs, Out_pad) -- transposed once here (clean (K,N) rhs for
             the MXU) and zero-padded so Out_pad is a multiple of 128 (lane-dense
             output store). Cast to bf16 when use_bf16=True (v6e/v7x MXU-native).
      b_pad: (1, Out_pad) f32 -- bias stays f32; the epilogue is always f32.
    """
    num_outputs, num_inputs = weight.shape
    out_pad = max(_LANE, pl.cdiv(num_outputs, _LANE) * _LANE)
    w_pad = (
        jnp.zeros((num_inputs, out_pad), jnp.float32)
        .at[:, :num_outputs]
        .set(weight.T.astype(jnp.float32))
    )
    if use_bf16:
        w_pad = w_pad.astype(jnp.bfloat16)
    b_pad = jnp.zeros((1, out_pad), jnp.float32).at[0, :num_outputs].set(bias)
    return w_pad, b_pad


@functools.partial(jax.jit, static_argnames=("num_outputs", "batch_tile"))
def controller_forward(x, w_pad, b_pad, *, num_outputs, batch_tile=512):
    """x: (B, num_inputs); w_pad: (num_inputs, Out_pad); b_pad: (1, Out_pad)."""
    B, num_inputs = x.shape
    out_pad = w_pad.shape[1]
    x_mm = x.astype(w_pad.dtype)  # bf16 MXU feed when params were prepped in bf16

    if B <= batch_tile:
        # Tiny batch: single invocation, whole operands resident in VMEM,
        # no grid-loop / double-buffering machinery.
        out_padded = pl.pallas_call(
            _controller_kernel,
            out_shape=jax.ShapeDtypeStruct((B, out_pad), jnp.float32),
            in_specs=[
                pl.BlockSpec(memory_space=pltpu.MemorySpace.VMEM),
                pl.BlockSpec(memory_space=pltpu.MemorySpace.VMEM),
                pl.BlockSpec(memory_space=pltpu.MemorySpace.VMEM),
            ],
            out_specs=pl.BlockSpec(memory_space=pltpu.MemorySpace.VMEM),
        )(x_mm, w_pad, b_pad)
    else:
        # Production-batch path: tile the batch axis; "parallel" lets Mosaic
        # shard tiles across both TensorCores on v7x (megacore on v5e/v6e).
        # Weight & bias index_maps return the same (0, 0) block every step, so
        # they are DMA'd once and stay grid-resident.
        b_padded = pl.cdiv(B, batch_tile) * batch_tile
        if b_padded != B:
            x_mm = jnp.pad(x_mm, ((0, b_padded - B), (0, 0)))
        out_padded = pl.pallas_call(
            _controller_kernel,
            out_shape=jax.ShapeDtypeStruct((b_padded, out_pad), jnp.float32),
            grid=(b_padded // batch_tile,),
            in_specs=[
                pl.BlockSpec((batch_tile, num_inputs), lambda i: (i, 0)),
                pl.BlockSpec((num_inputs, out_pad), lambda i: (0, 0)),
                pl.BlockSpec((1, out_pad), lambda i: (0, 0)),
            ],
            out_specs=pl.BlockSpec((batch_tile, out_pad), lambda i: (i, 0)),
            compiler_params=pltpu.CompilerParams(
                dimension_semantics=("parallel",)
            ),
        )(x_mm, w_pad, b_pad)
        out_padded = out_padded[:B]

    # TODO(synk): a downstream consumer that accepts the padded (B, Out_pad)
    # slab (masking cols >= num_outputs, which hold sigmoid(0)=0.5) -- or fusing
    # this layer into the adjacent Pallas kernel -- removes this slice and a
    # full dispatch + HBM roundtrip, which dominates wall time at small batch.
    return out_padded[:, :num_outputs]


if __name__ == "__main__":
    num_inputs, num_outputs = 32, 16

    key = jax.random.PRNGKey(0)
    k_x, k_w, k_b, k_x2 = jax.random.split(key, 4)

    # nn.Linear(num_inputs, num_outputs) with reset_parameters():
    #   weight ~ N(0, 1), bias ~ N(0, 0.01)
    weight = jax.random.normal(k_w, (num_outputs, num_inputs), dtype=jnp.float32)
    bias = jax.random.normal(k_b, (num_outputs,), dtype=jnp.float32) * 0.01

    # --- Path 1: small batch, f32 matmul, single no-grid invocation ----------
    batch = 8
    x = jax.random.normal(k_x, (batch, num_inputs), dtype=jnp.float32)
    w_pad, b_pad = prepare_controller_params(weight, bias, use_bf16=False)
    out = controller_forward(x, w_pad, b_pad, num_outputs=num_outputs)
    jax.block_until_ready(out)

    ref = jax.nn.sigmoid(x @ weight.T + bias)
    assert out.shape == (batch, num_outputs)
    assert jnp.allclose(out, ref, atol=2e-3, rtol=2e-3), float(
        jnp.max(jnp.abs(out - ref))
    )

    # --- Path 2: production batch, bf16 MXU feed, batch-tiled parallel grid --
    big_batch = 1024
    xb = jax.random.normal(k_x2, (big_batch, num_inputs), dtype=jnp.float32)
    w_pad16, b_pad16 = prepare_controller_params(weight, bias, use_bf16=True)
    out_big = controller_forward(
        xb, w_pad16, b_pad16, num_outputs=num_outputs, batch_tile=512
    )
    jax.block_until_ready(out_big)

    # Reference applies the same bf16 rounding to the matmul inputs
    # (f32 accumulation), matching the kernel's bf16-in / f32-acc MXU path.
    xb_bf = xb.astype(jnp.bfloat16).astype(jnp.float32)
    w_bf = weight.astype(jnp.bfloat16).astype(jnp.float32)
    ref_big = jax.nn.sigmoid(xb_bf @ w_bf.T + bias)
    assert out_big.shape == (big_batch, num_outputs)
    assert jnp.allclose(out_big, ref_big, atol=2e-3, rtol=2e-3), float(
        jnp.max(jnp.abs(out_big - ref_big))
    )

    print("KERNEL_OK")
</pallas_src>

<mosaic_0001>
module attributes {stable_mosaic.version = 11 : i64} {
  func.func @_controller_kernel(%arg0: memref<8x32xf32, #tpu.memory_space<vmem>>, %arg1: memref<32x128xf32, #tpu.memory_space<vmem>>, %arg2: memref<1x128xf32, #tpu.memory_space<vmem>>, %arg3: memref<8x128xf32, #tpu.memory_space<vmem>>) attributes {dimension_semantics = [], scalar_prefetch = 0 : i64, scratch_operands = 0 : i64, tpu.core_type = #tpu.core_type<tc>} {
    %c0 = arith.constant 0 : index
    %c0_0 = arith.constant 0 : index
    %0 = vector.load %arg0[%c0, %c0_0] : memref<8x32xf32, #tpu.memory_space<vmem>>, vector<8x32xf32>
    %c0_1 = arith.constant 0 : index
    %c0_2 = arith.constant 0 : index
    %1 = vector.load %arg1[%c0_1, %c0_2] : memref<32x128xf32, #tpu.memory_space<vmem>>, vector<32x128xf32>
    %cst = arith.constant dense<0.000000e+00> : vector<8x128xf32>
    %2 = tpu.matmul %0, %1, %cst {dimension_numbers = #tpu.dot_dimension_numbers<[1], [0], [0], [1], [0, 0, 1, 1], [], []>} : vector<8x32xf32>, vector<32x128xf32>, vector<8x128xf32> -> vector<8x128xf32>
    %c0_3 = arith.constant 0 : index
    %c0_4 = arith.constant 0 : index
    %3 = vector.load %arg2[%c0_3, %c0_4] : memref<1x128xf32, #tpu.memory_space<vmem>>, vector<1x128xf32>
    %4 = vector.broadcast %3 : vector<1x128xf32> to vector<8x128xf32>
    %5 = arith.addf %2, %4 : vector<8x128xf32>
    %cst_5 = arith.constant -3.000000e+01 : f32
    %cst_6 = arith.constant 3.000000e+01 : f32
    %6 = vector.broadcast %cst_5 : f32 to vector<8x128xf32>
    %7 = arith.maximumf %6, %5 : vector<8x128xf32>
    %8 = vector.broadcast %cst_6 : f32 to vector<8x128xf32>
    %9 = arith.minimumf %8, %7 : vector<8x128xf32>
    %cst_7 = arith.constant 0.000000e+00 : f32
    %10 = vector.broadcast %cst_7 : f32 to vector<8x128xf32>
    %11 = arith.subf %10, %9 : vector<8x128xf32>
    %12 = math.exp %11 : vector<8x128xf32>
    %cst_8 = arith.constant 1.000000e+00 : f32
    %13 = vector.broadcast %cst_8 : f32 to vector<8x128xf32>
    %14 = arith.addf %13, %12 : vector<8x128xf32>
    %cst_9 = arith.constant 1.000000e+00 : f32
    %15 = vector.broadcast %cst_9 : f32 to vector<8x128xf32>
    %16 = arith.divf %15, %14 : vector<8x128xf32>
    %c0_10 = arith.constant 0 : index
    %c0_11 = arith.constant 0 : index
    %17 = vector.load %arg3[%c0_10, %c0_11] : memref<8x128xf32, #tpu.memory_space<vmem>>, vector<8x128xf32>
    tpu.vector_store %arg3[%c0_10, %c0_11], %16 {strides = array<i32>} : memref<8x128xf32, #tpu.memory_space<vmem>>, vector<8x128xf32>,
    return
  }
}

</mosaic_0001>

<llo_original>
// kernel: controller_forward.1
$region0: #{controller_forward.1}
  #allocation0 [shape = 'u32[]', space=smem, size = 0x4, offset = 0x4, fixed_abs, tag = 'smem constant byte address 0x4 - core index']
  #allocation1 [shape = 'u32[144,128]{1,0:T(1,128)}', space=vmem, size = 0x12000, scoped, tag = 'internal scratch']
  %s0 = inlined_call_operand.hbm [shape: f32[8,32], index: 0, kind: input, shape index: {}]
  %s1 = inlined_call_operand.hbm [shape: f32[32,128], index: 1, kind: input, shape index: {}]
  %s2 = inlined_call_operand.vmem [shape: f32[1,128], index: 2, kind: input, shape index: {}]
  %s3 = inlined_call_operand.hbm [shape: f32[8,128], index: 3, kind: output, shape index: {}]
  %s4 = sld [smem:[#allocation0]]
  $region30: #{controller_forward.1} parent=0
    _
  %s6 = ssub.s32 1, %s4
  %s7 = scalar_select 0, %s6, %s4
  $region1: #{controller_forward.1} parent=0
    #allocation2 [shape = 'u8[4096]{0}', space=vmem, size = 0x1000, scoped, tag = 'input window, operand 0, single buffered']
    #allocation3 [shape = 's32[1]{0}', space=sflag, size = 0x4, scoped, tag = 'scoped memory for controller_forward.1']
    #allocation4 [shape = 's32[1]{0}', space=sflag, size = 0x4, scoped, tag = 'scoped memory for controller_forward.1']
    #allocation5 [shape = 'u8[16384]{0}', space=vmem, size = 0x4000, scoped, tag = 'input window, operand 1, single buffered']
    #allocation6 [shape = 's32[1]{0}', space=sflag, size = 0x4, scoped, tag = 'scoped memory for controller_forward.1']
    #allocation7 [shape = 'u8[4096]{0}', space=vmem, size = 0x1000, scoped, tag = 'output window, operand 0, single buffered']
    %8 = vsyncpa [#allocation3], 0
    %9 = vsyncpa [#allocation6], 0
    %10 = vsyncpa [#allocation4], 0
    // Predicated region
    $region2: #{controller_forward.1} parent=1 // pred_check
      _
    $region3: #{controller_forward.1} parent=1 // pred_check_branch
      %12 = sbr.rel (0) target = $region5
    $region4: #{controller_forward.1} parent=1 // pred_region
      %s14 = ssub.s32 128, 128
      %15 = vsyncadd [#allocation3], %s14
      %s17 = sshll.u32 [#allocation2], 4
      %s18 = int_to_ptr.vmem [resolvable:$true] %s17
      %20 = dma.hbm_to_vmem [thread:$0]  %s0, 128, %s18, [#allocation3]
    $region5: #{controller_forward.1} parent=1 // pred_fallthru
      _
    // Predicated region
    $region6: #{controller_forward.1} parent=1 // pred_check
      _
    $region7: #{controller_forward.1} parent=1 // pred_check_branch
      %22 = sbr.rel (0) target = $region9
    $region8: #{controller_forward.1} parent=1 // pred_region
      %s24 = ssub.s32 512, 512
      %25 = vsyncadd [#allocation6], %s24
      %s26 = sshll.u32 [#allocation5], 4
      %s27 = int_to_ptr.vmem [resolvable:$true] %s26
      %32 = dma.hbm_to_vmem [thread:$0]  %s1, 512, %s27, [#allocation6], 128, 128, 8
    $region9: #{controller_forward.1} parent=1 // pred_fallthru
      _
    // Predicated region
    $region10: #{controller_forward.1} parent=1 // pred_check
      _
    $region11: #{controller_forward.1} parent=1 // pred_check_branch
      %34 = sbr.rel (0) target = $region13
    $region12: #{controller_forward.1} parent=1 // pred_region
      _
    $region13: #{controller_forward.1} parent=1 // pred_fallthru
      _
    // Predicated region
    $region14: #{controller_forward.1} parent=1 // pred_check
      _
    $region15: #{controller_forward.1} parent=1 // pred_check_branch
      %36 = sbr.rel (0) target = $region17
    $region16: #{controller_forward.1} parent=1 // pred_region
      %37 = dma.done [#allocation3], 128
    $region17: #{controller_forward.1} parent=1 // pred_fallthru
      _
    // Predicated region
    $region18: #{controller_forward.1} parent=1 // pred_check
      _
    $region19: #{controller_forward.1} parent=1 // pred_check_branch
      %39 = sbr.rel (0) target = $region21
    $region20: #{controller_forward.1} parent=1 // pred_region
      %40 = dma.done [#allocation6], 512
    $region21: #{controller_forward.1} parent=1 // pred_fallthru
      _
    %v41 = vld [vmem:[#allocation2] sm:$0xff]
    %v42 = vld [vmem:[#allocation5] sm:$0xff]
    %v43 = vld [vmem:[#allocation5 + $0x8] sm:$0xff]
    %v44 = vld [vmem:[#allocation5 + $0x10] sm:$0xff]
    %v45 = vld [vmem:[#allocation5 + $0x18] sm:$0xff]
    %v46 = vld [vmem:[%s2] sm:$0x1]
    %v48 = vlaneseq
    %v49 = vshrl.u32 %v48, 7
    %v50 = vsub.s32 0, %v49
    %v51 = vrot.slane %v46, %v50
    %vm53 = vcmask 261120
    %v55 = vsel %vm53, %v41, 0
    %57 = vmatprep.subr.mxu0 0.0
    %58 = vmatpush1.msra.mxu0 %v42
    %59 = vmatprep.subr.mxu0 0.0
    %60 = vmatpush1.msra.mxu0 %v43
    %61 = vmatprep.subr.mxu0 0.0
    %62 = vmatpush1.msra.mxu0 %v44
    %63 = vmatprep.subr.mxu0 0.0
    %64 = vmatpush1.msra.mxu0 %v45
    %65 = vmatprep.subr.mxu0 0.0
    %66 = vmatpush1.msra.mxu0 0.0
    %67 = vmatprep.subr.mxu0 0.0
    %68 = vmatpush1.msra.mxu0 0.0
    %69 = vmatprep.subr.mxu0 0.0
    %70 = vmatpush1.msra.mxu0 0.0
    %71 = vmatprep.subr.mxu0 0.0
    %72 = vmatpush1.msra.mxu0 0.0
    %73 = vmatprep.subr.mxu0 0.0
    %74 = vmatpush1.msra.mxu0 0.0
    %75 = vmatprep.subr.mxu0 0.0
    %76 = vmatpush1.msra.mxu0 0.0
    %77 = vmatprep.subr.mxu0 0.0
    %78 = vmatpush1.msra.mxu0 0.0
    %79 = vmatprep.subr.mxu0 0.0
    %80 = vmatpush1.msra.mxu0 0.0
    %81 = vmatprep.subr.mxu0 0.0
    %82 = vmatpush1.msra.mxu0 0.0
    %83 = vmatprep.subr.mxu0 0.0
    %84 = vmatpush1.msra.mxu0 0.0
    %85 = vmatprep.subr.mxu0 0.0
    %86 = vmatpush1.msra.mxu0 0.0
    %87 = vmatprep.subr.mxu0 0.0
    %88 = vmatpush1.msra.mxu0 0.0
    %89 = vmatprep.subr.mxu0 0.0
    %90 = vmatpush1.msra.mxu0 0.0
    %91 = vmatprep.subr.mxu0 0.0
    %92 = vmatpush1.msra.mxu0 0.0
    %93 = vmatprep.subr.mxu0 0.0
    %94 = vmatpush1.msra.mxu0 0.0
    %95 = vmatprep.subr.mxu0 0.0
    %96 = vmatpush1.msra.mxu0 0.0
    %97 = vmatprep.subr.mxu0 0.0
    %98 = vmatpush1.msra.mxu0 0.0
    %99 = vmatprep.subr.mxu0 0.0
    %100 = vmatpush1.msra.mxu0 0.0
    %101 = vmatprep.subr.mxu0 0.0
    %102 = vmatpush1.msra.mxu0 0.0
    %103 = vmatprep.subr.mxu0 0.0
    %104 = vmatpush1.msra.mxu0 0.0
    %105 = vmatprep.subr.mxu0 0.0
    %106 = vmatpush1.msra.mxu0 0.0
    %107 = vmatprep.subr.mxu0 0.0
    %108 = vmatpush1.msra.mxu0 0.0
    %109 = vmatprep.subr.mxu0 0.0
    %110 = vmatpush1.msra.mxu0 0.0
    %111 = vmatprep.subr.mxu0 0.0
    %112 = vmatpush1.msra.mxu0 0.0
    %113 = vmatprep.subr.mxu0 0.0
    %114 = vmatpush1.msra.mxu0 0.0
    %115 = vmatprep.subr.mxu0 0.0
    %116 = vmatpush1.msra.mxu0 0.0
    %117 = vmatprep.subr.mxu0 0.0
    %118 = vmatpush1.msra.mxu0 0.0
    %119 = vmatprep.subr.mxu0 0.0
    %120 = vmatpush1.msra.mxu0 0.0
    %121 = vmatprep.mubr.f32.mxu0 0.0
    %122 = vmatmul.mubr.f32.gmra.mrb[0].mxu0 %v55
    %v123 = vpop.f32.mrb[0].mxu0
    %v124 = vadd.f32 %v51, %v123
    %v125 = vpop.f32.mrb[0].mxu0
    %126 = vdwg.mxu0
    %v127 = vmax.f32 %v124, -30.0
    %v128 = vmin.f32 %v127, 30.0
    %v129 = vsub.f32 0.0, %v128
    %v130 = vmul.f32 %v129, 1.442695
    %v131 = vpow.pop %v130
    %v132 = vadd.f32 %v131, 1.0
    %v133 = vrcp.pop %v132
    %v134 = vmul.f32 1.0, %v133
    %135 = vst [vmem:[#allocation7] sm:$0xff] %v134
    // Predicated region
    $region22: #{controller_forward.1} parent=1 // pred_check
      _
    $region23: #{controller_forward.1} parent=1 // pred_check_branch
      %137 = sbr.rel (0) target = $region25
    $region24: #{controller_forward.1} parent=1 // pred_region
      %s139 = ssub.s32 128, 128
      %140 = vsyncadd [#allocation4], %s139
      %s142 = sshll.u32 [#allocation7], 4
      %s143 = int_to_ptr.vmem [resolvable:$true] %s142
      %145 = dma.vmem_to_hbm [thread:$0]  %s143, 128, %s3, [#allocation4]
    $region25: #{controller_forward.1} parent=1 // pred_fallthru
      _
    // Predicated region
    $region26: #{controller_forward.1} parent=1 // pred_check
      _
    $region27: #{controller_forward.1} parent=1 // pred_check_branch
      %147 = sbr.rel (0) target = $region29
    $region28: #{controller_forward.1} parent=1 // pred_region
      %148 = dma.done [#allocation4], 128
    $region29: #{controller_forward.1} parent=1 // pred_fallthru
      _
    %149 = vsyncpa [#allocation3], 1
    %150 = vsyncpa [#allocation6], 1
    %151 = vsyncpa [#allocation4], 1

</llo_original>
